<compile_context>
chip_gen: v6e
topology: v6e:2x2x1
jax: 0.10.0
libtpu: 0.0.40
codegen_flags: <defaults>
</compile_context>

<pallas_src>
import jax
import jax.numpy as jnp
from jax.experimental import pallas as pl
from jax.experimental.pallas import tpu as pltpu

LANE = 128
ROW_ALIGN = 16          # row (sublane) alignment; 16 keeps bf16 blocks packed-tile friendly
BN_EPS = 1e-5
NEG_MASK = -1e30        # baked class-lane mask value for padded softmax lanes


def _round_up(n, m):
    return ((n + m - 1) // m) * m


def _cdiv(a, b):
    return (a + b - 1) // b


# ------------------------------- Pallas kernel -------------------------------

def _fused_cnn_kernel(x_ref, wc_ref, w1_ref, w2_ref, w3_ref, w4_ref, o_ref):
    """conv(+bias+BN folded) -> ReLU -> fc1..fc3(+ReLU) -> fc4 -> softmax.

    Biases ride in each weight's "bias row" via the constant-1 activation lane,
    and the padded-class mask is baked into w4, so the body is just five bf16
    MXU matmuls (f32 accumulation), ReLUs and a softmax epilogue.
    """
    h = jnp.dot(x_ref[...], wc_ref[...], preferred_element_type=jnp.float32)
    h = jnp.maximum(h, 0.0)                                               # conv+bias+BN+ReLU
    h = jnp.dot(h.astype(jnp.bfloat16), w1_ref[...],
                preferred_element_type=jnp.float32)
    h = jnp.maximum(h, 0.0)                                               # fc1 + ReLU
    h = jnp.dot(h.astype(jnp.bfloat16), w2_ref[...],
                preferred_element_type=jnp.float32)
    h = jnp.maximum(h, 0.0)                                               # fc2 + ReLU
    h = jnp.dot(h.astype(jnp.bfloat16), w3_ref[...],
                preferred_element_type=jnp.float32)
    h = jnp.maximum(h, 0.0)                                               # fc3 + ReLU
    logits = jnp.dot(h.astype(jnp.bfloat16), w4_ref[...],
                     preferred_element_type=jnp.float32)                  # fc4 (+bias+mask)
    # Padded class lanes already hold -1e30 (baked into w4's bias row) -> softmax.
    m = jnp.max(logits, axis=1, keepdims=True)
    e = jnp.exp(logits - m)
    inv = pl.reciprocal(jnp.sum(e, axis=1, keepdims=True), approx=True)
    o_ref[...] = e * inv


# --------------------------- weight / tiling helpers ---------------------------

def _pack_layer(w, b, *, add_ones_lane, mask_padded_out=False):
    """Pad w (d_in, d_out) to a lane-aligned (Kp, Np) bf16 MXU operand, folding
    the bias into row d_in (fed by the constant-1 activation lane).
    add_ones_lane: also write 1.0 at [d_in, d_out] so the next layer's
    activations carry the constant-1 lane through ReLU.
    mask_padded_out: write -1e30 into the padded output lanes of the bias row
    (class-lane mask for the softmax)."""
    d_in, d_out = w.shape
    out_cols = d_out + (1 if add_ones_lane else 0)
    kp = _round_up(d_in + 1, LANE)
    npad = _round_up(out_cols, LANE)
    m = jnp.zeros((kp, npad), jnp.float32)
    m = m.at[:d_in, :d_out].set(w)
    m = m.at[d_in, :d_out].set(b)
    if add_ones_lane:
        m = m.at[d_in, d_out].set(1.0)
    if mask_padded_out:
        m = m.at[d_in, d_out:].set(NEG_MASK)
    return m.astype(jnp.bfloat16)


def _choose_row_tiling(batch, target_rows=1024):
    """Return (row_tile, padded_rows). Single tile when it fits the target;
    otherwise pick an EVEN number of tiles (>=2) so v7x's two TensorCores split
    the "parallel" axis evenly, and size the tile to minimise tail padding
    (rather than a fixed 512-row cap). 1024-row tiles amortise the ~0.35us
    per-step overhead and give large DMA bursts on v5e/v6e; VMEM use stays well
    under the 16 MiB v5e scoped default so no vmem_limit_bytes bump is needed."""
    rows = _round_up(batch, ROW_ALIGN)
    if rows <= target_rows:
        return rows, rows
    n_tiles = 2 * _cdiv(_cdiv(rows, 2), target_rows)
    row_tile = _round_up(_cdiv(rows, n_tiles), ROW_ALIGN)
    return row_tile, row_tile * n_tiles


# ------------------------------- Python wrapper -------------------------------

def _cnn_forward_impl(x, params):
    """Forward pass equivalent to CNN.forward. x: (B, 1, factor_num, k) f32."""
    B = x.shape[0]
    factor_num, cols = x.shape[2], x.shape[3]
    conv_w = params["conv_w"]                       # (OC, 1, k, k)
    OC, _, k, _ = conv_w.shape
    assert cols == k, "width must equal kernel_size (implied by fc1's in_features)"
    L = factor_num - k + 1
    num_classes = params["b4"].shape[0]
    in1 = params["b1"].shape[0]
    assert params["w1"].shape == (in1, L * OC)

    # ---- fold conv bias + BatchNorm (inference) into the conv weights ----
    scale = params["bn_gamma"] / jnp.sqrt(params["bn_var"] + BN_EPS)       # (OC,)
    shift = params["bn_beta"] - params["bn_mean"] * scale                  # (OC,)
    wcs = conv_w[:, 0] * scale[:, None, None]                              # (OC, k, k)
    bias0 = params["conv_b"] * scale + shift                               # (OC,)

    # ---- fold im2col into one (factor_num*k, L*OC) matrix; out col = l*OC+oc ----
    w_t = jnp.transpose(wcs, (1, 2, 0))                                    # (k, k, OC)
    w_conv = jnp.concatenate(
        [jnp.pad(w_t, ((l, factor_num - k - l), (0, 0), (0, 0)))
             .reshape(factor_num * cols, OC)
         for l in range(L)],
        axis=1)                                                            # (fn*k, L*OC)
    b_conv = jnp.tile(bias0, L)                                            # (L*OC,)

    # ---- fold the torch flatten order (oc*L + l) into fc1's weight ----
    w1p = jnp.transpose(params["w1"].reshape(in1, OC, L), (2, 1, 0)).reshape(L * OC, in1)

    # ---- pack: lane padding + bias row + ones lane + class mask, bf16 operands ----
    weights = (
        _pack_layer(w_conv, b_conv, add_ones_lane=True),
        _pack_layer(w1p, params["b1"], add_ones_lane=True),
        _pack_layer(params["w2"].T, params["b2"], add_ones_lane=True),
        _pack_layer(params["w3"].T, params["b3"], add_ones_lane=True),
        _pack_layer(params["w4"].T, params["b4"], add_ones_lane=False,
                    mask_padded_out=True),
    )
    d_in_real = factor_num * cols
    d_in = weights[0].shape[0]
    d_out = weights[-1].shape[1]

    # Row-tiled "parallel" grid; see _choose_row_tiling for v5e/v6e/v7x sizing.
    row_tile, Bp = _choose_row_tiling(B)

    # x: flatten, append the constant-1 bias lane at column d_in_real, zero-pad
    # rows/lanes, and narrow to bf16 (the read was already 2.7x the real bytes
    # after lane padding; bf16 halves the HBM traffic on the batch-scaling path).
    x_flat = x.reshape(B, d_in_real)
    x_aug = jnp.concatenate([x_flat, jnp.ones((B, 1), x.dtype)], axis=1)
    x_pad = jnp.pad(x_aug, ((0, Bp - B), (0, d_in - (d_in_real + 1))))
    x_pad = x_pad.astype(jnp.bfloat16)

    in_specs = [pl.BlockSpec((row_tile, d_in), lambda i: (i, 0))]
    # Grid-invariant weights, one full block each (~230 KiB bf16 total, so the
    # default double-buffering costs <0.25 MiB; switch these specs to
    # pipeline_mode=pl.Buffered(1) only if VMEM ever becomes the constraint).
    in_specs += [pl.BlockSpec(w.shape, lambda i: (0, 0)) for w in weights]

    probs_pad = pl.pallas_call(
        _fused_cnn_kernel,
        out_shape=jax.ShapeDtypeStruct((Bp, d_out), jnp.float32),
        grid=(Bp // row_tile,),
        in_specs=in_specs,
        out_specs=pl.BlockSpec((row_tile, d_out), lambda i: (i, 0)),
        compiler_params=pltpu.CompilerParams(dimension_semantics=("parallel",)),
    )(x_pad, *weights)
    return probs_pad[:B, :num_classes]


cnn_forward = jax.jit(_cnn_forward_impl)


# ------------------------- pure-JAX reference (check) -------------------------

def _reference_forward(x, params, eps=BN_EPS):
    """Pure-JAX f32 mirror of the PyTorch module (BatchNorm in eval mode)."""
    B = x.shape[0]
    conv_w = params["conv_w"]
    OC, _, k, _ = conv_w.shape
    factor_num = x.shape[2]
    L = factor_num - k + 1
    patches = jnp.stack([x[:, 0, l:l + k, :] for l in range(L)], axis=1)   # (B,L,k,k)
    z = jnp.einsum("blij,oij->bol", patches, conv_w[:, 0])
    z = z + params["conv_b"][None, :, None]
    scale = params["bn_gamma"] / jnp.sqrt(params["bn_var"] + eps)
    shift = params["bn_beta"] - params["bn_mean"] * scale
    z = jnp.maximum(z * scale[None, :, None] + shift[None, :, None], 0.0)
    h = z.reshape(B, OC * L)                          # torch flatten of (B,OC,L,1)
    h = jnp.maximum(h @ params["w1"].T + params["b1"], 0.0)
    h = jnp.maximum(h @ params["w2"].T + params["b2"], 0.0)
    h = jnp.maximum(h @ params["w3"].T + params["b3"], 0.0)
    logits = h @ params["w4"].T + params["b4"]
    return jax.nn.softmax(logits, axis=1)


# ----------------------------------- setup ------------------------------------

def init_params(key, factor_num, kernel_size, out_channels, in1, in2, in3):
    L = factor_num - kernel_size + 1
    F = L * out_channels                              # fc1 input features
    ks = jax.random.split(key, 10)

    def u(k, shape, fan_in):
        bound = 1.0 / jnp.sqrt(jnp.float32(fan_in))
        return jax.random.uniform(k, shape, jnp.float32, -bound, bound)

    return dict(
        conv_w=u(ks[0], (out_channels, 1, kernel_size, kernel_size),
                 kernel_size * kernel_size),
        conv_b=u(ks[1], (out_channels,), kernel_size * kernel_size),
        bn_gamma=jnp.ones((out_channels,), jnp.float32),
        bn_beta=jnp.zeros((out_channels,), jnp.float32),
        bn_mean=jnp.zeros((out_channels,), jnp.float32),
        bn_var=jnp.ones((out_channels,), jnp.float32),
        w1=u(ks[2], (in1, F), F),     b1=u(ks[3], (in1,), F),
        w2=u(ks[4], (in2, in1), in1), b2=u(ks[5], (in2,), in1),
        w3=u(ks[6], (in3, in2), in2), b3=u(ks[7], (in3,), in2),
        w4=u(ks[8], (2, in3), in3),   b4=u(ks[9], (2,), in3),
    )


if __name__ == "__main__":
    # args = [kernel_size, out_channels, dropout_rate, in1, in2, in3]
    kernel_size, out_channels = 3, 10                 # BatchNorm2d(10) forces OC=10
    in1, in2, in3 = 32, 16, 8
    batch, factor_num, cols = 2, 16, kernel_size      # x: (B, 1, factor_num, k)

    key = jax.random.PRNGKey(0)
    k_x, k_p = jax.random.split(key)
    x = jax.random.normal(k_x, (batch, 1, factor_num, cols), jnp.float32)
    params = init_params(k_p, factor_num, kernel_size, out_channels, in1, in2, in3)

    out = jax.block_until_ready(cnn_forward(x, params))
    ref = jax.block_until_ready(_reference_forward(x, params))

    assert out.shape == (batch, 2)
    assert bool(jnp.all(jnp.isfinite(out)))
    assert bool(jnp.allclose(jnp.sum(out, axis=1), 1.0, atol=5e-3))
    # bf16 MXU operands (f32 accumulation) vs. the f32 reference.
    assert bool(jnp.allclose(out, ref, atol=3e-2)), (out, ref)
    print("KERNEL_OK")
</pallas_src>

<mosaic_0001>
module attributes {stable_mosaic.version = 11 : i64} {
  func.func @_fused_cnn_kernel(%arg0: i32, %arg1: memref<16x128xbf16, #tpu.memory_space<vmem>>, %arg2: memref<128x256xbf16, #tpu.memory_space<vmem>>, %arg3: memref<256x128xbf16, #tpu.memory_space<vmem>>, %arg4: memref<128x128xbf16, #tpu.memory_space<vmem>>, %arg5: memref<128x128xbf16, #tpu.memory_space<vmem>>, %arg6: memref<128x128xbf16, #tpu.memory_space<vmem>>, %arg7: memref<16x128xf32, #tpu.memory_space<vmem>>) attributes {dimension_semantics = [#tpu.dimension_semantics<parallel>], iteration_bounds = array<i64: 1>, scalar_prefetch = 0 : i64, scratch_operands = 0 : i64, tpu.core_type = #tpu.core_type<tc>, window_params = [{transform_indices = @transform_0, window_bounds = array<i64: 16, 128>}, {pipeline_mode = #tpu.pipeline_mode<synchronous>, transform_indices = @transform_1, window_bounds = array<i64: 128, 256>}, {pipeline_mode = #tpu.pipeline_mode<synchronous>, transform_indices = @transform_2, window_bounds = array<i64: 256, 128>}, {pipeline_mode = #tpu.pipeline_mode<synchronous>, transform_indices = @transform_3, window_bounds = array<i64: 128, 128>}, {pipeline_mode = #tpu.pipeline_mode<synchronous>, transform_indices = @transform_4, window_bounds = array<i64: 128, 128>}, {pipeline_mode = #tpu.pipeline_mode<synchronous>, transform_indices = @transform_5, window_bounds = array<i64: 128, 128>}, {transform_indices = @transform_6, window_bounds = array<i64: 16, 128>}]} {
    %c0 = arith.constant 0 : index
    %c0_0 = arith.constant 0 : index
    %0 = vector.load %arg1[%c0, %c0_0] : memref<16x128xbf16, #tpu.memory_space<vmem>>, vector<16x128xbf16>
    %c0_1 = arith.constant 0 : index
    %c0_2 = arith.constant 0 : index
    %1 = vector.load %arg2[%c0_1, %c0_2] : memref<128x256xbf16, #tpu.memory_space<vmem>>, vector<128x256xbf16>
    %cst = arith.constant dense<0.000000e+00> : vector<16x256xf32>
    %2 = tpu.matmul %0, %1, %cst {dimension_numbers = #tpu.dot_dimension_numbers<[1], [0], [0], [1], [0, 0, 1, 1], [], []>} : vector<16x128xbf16>, vector<128x256xbf16>, vector<16x256xf32> -> vector<16x256xf32>
    %cst_3 = arith.constant 0.000000e+00 : f32
    %3 = vector.broadcast %cst_3 : f32 to vector<16x256xf32>
    %4 = arith.maximumf %2, %3 : vector<16x256xf32>
    %5 = arith.truncf %4 : vector<16x256xf32> to vector<16x256xbf16>
    %c0_4 = arith.constant 0 : index
    %c0_5 = arith.constant 0 : index
    %6 = vector.load %arg3[%c0_4, %c0_5] : memref<256x128xbf16, #tpu.memory_space<vmem>>, vector<256x128xbf16>
    %cst_6 = arith.constant dense<0.000000e+00> : vector<16x128xf32>
    %7 = tpu.matmul %5, %6, %cst_6 {dimension_numbers = #tpu.dot_dimension_numbers<[1], [0], [0], [1], [0, 0, 1, 1], [], []>} : vector<16x256xbf16>, vector<256x128xbf16>, vector<16x128xf32> -> vector<16x128xf32>
    %cst_7 = arith.constant 0.000000e+00 : f32
    %8 = vector.broadcast %cst_7 : f32 to vector<16x128xf32>
    %9 = arith.maximumf %7, %8 : vector<16x128xf32>
    %10 = arith.truncf %9 : vector<16x128xf32> to vector<16x128xbf16>
    %c0_8 = arith.constant 0 : index
    %c0_9 = arith.constant 0 : index
    %11 = vector.load %arg4[%c0_8, %c0_9] : memref<128x128xbf16, #tpu.memory_space<vmem>>, vector<128x128xbf16>
    %cst_10 = arith.constant dense<0.000000e+00> : vector<16x128xf32>
    %12 = tpu.matmul %10, %11, %cst_10 {dimension_numbers = #tpu.dot_dimension_numbers<[1], [0], [0], [1], [0, 0, 1, 1], [], []>} : vector<16x128xbf16>, vector<128x128xbf16>, vector<16x128xf32> -> vector<16x128xf32>
    %cst_11 = arith.constant 0.000000e+00 : f32
    %13 = vector.broadcast %cst_11 : f32 to vector<16x128xf32>
    %14 = arith.maximumf %12, %13 : vector<16x128xf32>
    %15 = arith.truncf %14 : vector<16x128xf32> to vector<16x128xbf16>
    %c0_12 = arith.constant 0 : index
    %c0_13 = arith.constant 0 : index
    %16 = vector.load %arg5[%c0_12, %c0_13] : memref<128x128xbf16, #tpu.memory_space<vmem>>, vector<128x128xbf16>
    %cst_14 = arith.constant dense<0.000000e+00> : vector<16x128xf32>
    %17 = tpu.matmul %15, %16, %cst_14 {dimension_numbers = #tpu.dot_dimension_numbers<[1], [0], [0], [1], [0, 0, 1, 1], [], []>} : vector<16x128xbf16>, vector<128x128xbf16>, vector<16x128xf32> -> vector<16x128xf32>
    %cst_15 = arith.constant 0.000000e+00 : f32
    %18 = vector.broadcast %cst_15 : f32 to vector<16x128xf32>
    %19 = arith.maximumf %17, %18 : vector<16x128xf32>
    %20 = arith.truncf %19 : vector<16x128xf32> to vector<16x128xbf16>
    %c0_16 = arith.constant 0 : index
    %c0_17 = arith.constant 0 : index
    %21 = vector.load %arg6[%c0_16, %c0_17] : memref<128x128xbf16, #tpu.memory_space<vmem>>, vector<128x128xbf16>
    %cst_18 = arith.constant dense<0.000000e+00> : vector<16x128xf32>
    %22 = tpu.matmul %20, %21, %cst_18 {dimension_numbers = #tpu.dot_dimension_numbers<[1], [0], [0], [1], [0, 0, 1, 1], [], []>} : vector<16x128xbf16>, vector<128x128xbf16>, vector<16x128xf32> -> vector<16x128xf32>
    %cst_19 = arith.constant dense<0xFF800000> : vector<16xf32>
    %23 = vector.multi_reduction <maximumf>, %22, %cst_19 [1] : vector<16x128xf32> to vector<16xf32>
    %24 = vector.shape_cast %23 : vector<16xf32> to vector<16x1xf32>
    %25 = vector.broadcast %24 : vector<16x1xf32> to vector<16x128xf32>
    %26 = arith.subf %22, %25 : vector<16x128xf32>
    %27 = math.exp %26 : vector<16x128xf32>
    %cst_20 = arith.constant dense<0.000000e+00> : vector<16xf32>
    %28 = vector.multi_reduction <add>, %27, %cst_20 [1] : vector<16x128xf32> to vector<16xf32>
    %29 = vector.shape_cast %28 : vector<16xf32> to vector<16x1xf32>
    %30 = tpu.reciprocal %29 {approx = true} : vector<16x1xf32> -> vector<16x1xf32>
    %31 = vector.broadcast %30 : vector<16x1xf32> to vector<16x128xf32>
    %32 = arith.mulf %27, %31 : vector<16x128xf32>
    %c0_21 = arith.constant 0 : index
    %c0_22 = arith.constant 0 : index
    %33 = vector.load %arg7[%c0_21, %c0_22] : memref<16x128xf32, #tpu.memory_space<vmem>>, vector<16x128xf32>
    tpu.vector_store %arg7[%c0_21, %c0_22], %32 {strides = array<i32>} : memref<16x128xf32, #tpu.memory_space<vmem>>, vector<16x128xf32>,
    return
  }
  func.func @transform_0(%arg0: i32) -> (i32, i32) {
    %c0_i32 = arith.constant 0 : i32
    %c0_i32_0 = arith.constant 0 : i32
    return %arg0, %c0_i32 : i32, i32
  }
  func.func @transform_1(%arg0: i32) -> (i32, i32) {
    %c0_i32 = arith.constant 0 : i32
    %c0_i32_0 = arith.constant 0 : i32
    %c0_i32_1 = arith.constant 0 : i32
    return %c0_i32, %c0_i32_0 : i32, i32
  }
  func.func @transform_2(%arg0: i32) -> (i32, i32) {
    %c0_i32 = arith.constant 0 : i32
    %c0_i32_0 = arith.constant 0 : i32
    %c0_i32_1 = arith.constant 0 : i32
    return %c0_i32, %c0_i32_0 : i32, i32
  }
  func.func @transform_3(%arg0: i32) -> (i32, i32) {
    %c0_i32 = arith.constant 0 : i32
    %c0_i32_0 = arith.constant 0 : i32
    %c0_i32_1 = arith.constant 0 : i32
    return %c0_i32, %c0_i32_0 : i32, i32
  }
  func.func @transform_4(%arg0: i32) -> (i32, i32) {
    %c0_i32 = arith.constant 0 : i32
    %c0_i32_0 = arith.constant 0 : i32
    %c0_i32_1 = arith.constant 0 : i32
    return %c0_i32, %c0_i32_0 : i32, i32
  }
  func.func @transform_5(%arg0: i32) -> (i32, i32) {
    %c0_i32 = arith.constant 0 : i32
    %c0_i32_0 = arith.constant 0 : i32
    %c0_i32_1 = arith.constant 0 : i32
    return %c0_i32, %c0_i32_0 : i32, i32
  }
  func.func @transform_6(%arg0: i32) -> (i32, i32) {
    %c0_i32 = arith.constant 0 : i32
    %c0_i32_0 = arith.constant 0 : i32
    return %arg0, %c0_i32 : i32, i32
  }
}

</mosaic_0001>

<llo_original>
// kernel: tile.8
$region0: #{tile.8}
  #allocation0 [shape = 's32[1]{0}', space=sflag, size = 0x4, scoped, tag = 'scoped memory for tile.8']
  %s0 = inlined_call_operand.vmem [shape: bf16[10], index: 0, kind: input, shape index: {}]
  %s1 = inlined_call_operand.vmem [shape: bf16[14,10], index: 1, kind: output, shape index: {}]
  // Predicated region
  $region2: #{tile.8} parent=0 // pred_check
    _
  $region3: #{tile.8} parent=0 // pred_check_branch
    %3 = sbr.rel (0) target = $region5
  $region4: #{tile.8} parent=0 // pred_region
    _
  $region5: #{tile.8} parent=0 // pred_fallthru
    _
  %v4 = vld [vmem:[%s0] ss:$0 sm:$0xff]
  %v5 = vunpack.i.l.bf16 %v4
  %v7 = vunpack.i.h.bf16 %v4
  %v9 = vpack.c.bf16 0.0, %v5
  %10 = vst [vmem:[%s1] sm:$0xf] %v9
  %s11 = scalar_lea.vmem %s1, 4
  %v12 = vpack.c.bf16 0.0, %v5
  %13 = vst [vmem:[%s11] sm:$0xf] %v12

// kernel: _cnn_forward_impl.1
$region0: #{_cnn_forward_impl.1}
  #allocation0 [shape = 'u32[]', space=smem, size = 0x4, offset = 0x4, fixed_abs, tag = 'smem constant byte address 0x4 - core index']
  #allocation1 [shape = 'u32[144,128]{1,0:T(1,128)}', space=vmem, size = 0x12000, scoped, tag = 'internal scratch']
  %s0 = inlined_call_operand.vmem [shape: bf16[16,128], index: 0, kind: input, shape index: {}]
  %s1 = inlined_call_operand.vmem [shape: bf16[128,256], index: 1, kind: input, shape index: {}]
  %s2 = inlined_call_operand.vmem [shape: bf16[256,128], index: 2, kind: input, shape index: {}]
  %s3 = inlined_call_operand.vmem [shape: bf16[128,128], index: 3, kind: input, shape index: {}]
  %s4 = inlined_call_operand.vmem [shape: bf16[128,128], index: 4, kind: input, shape index: {}]
  %s5 = inlined_call_operand.vmem [shape: bf16[128,128], index: 5, kind: input, shape index: {}]
  %s6 = inlined_call_operand.vmem [shape: f32[16,128], index: 6, kind: output, shape index: {}]
  %s7 = sld [smem:[#allocation0]]
  $region34: #{_cnn_forward_impl.1} parent=0
    _
  %s9 = ssub.s32 1, %s7
  %s10 = scalar_select 0, %s9, %s7
  // Predicated region
  $region2: #{_cnn_forward_impl.1} parent=0 // pred_check
    _
  $region3: #{_cnn_forward_impl.1} parent=0 // pred_check_branch
    %12 = sbr.rel (0) target = $region5
  $region4: #{_cnn_forward_impl.1} parent=0 // pred_region
    _
  $region5: #{_cnn_forward_impl.1} parent=0 // pred_fallthru
    _
  // Predicated region
  $region6: #{_cnn_forward_impl.1} parent=0 // pred_check
    _
  $region7: #{_cnn_forward_impl.1} parent=0 // pred_check_branch
    %14 = sbr.rel (0) target = $region9
  $region8: #{_cnn_forward_impl.1} parent=0 // pred_region
    _
  $region9: #{_cnn_forward_impl.1} parent=0 // pred_fallthru
    _
  // Predicated region
  $region10: #{_cnn_forward_impl.1} parent=0 // pred_check
    _
  $region11: #{_cnn_forward_impl.1} parent=0 // pred_check_branch
    %16 = sbr.rel (0) target = $region13
  $region12: #{_cnn_forward_impl.1} parent=0 // pred_region
    _
  $region13: #{_cnn_forward_impl.1} parent=0 // pred_fallthru
    _
  // Predicated region
  $region14: #{_cnn_forward_impl.1} parent=0 // pred_check
    _
  $region15: #{_cnn_forward_impl.1} parent=0 // pred_check_branch
    %18 = sbr.rel (0) target = $region17
  $region16: #{_cnn_forward_impl.1} parent=0 // pred_region
    _
  $region17: #{_cnn_forward_impl.1} parent=0 // pred_fallthru
    _
  // Predicated region
  $region18: #{_cnn_forward_impl.1} parent=0 // pred_check
    _
  $region19: #{_cnn_forward_impl.1} parent=0 // pred_check_branch
    %20 = sbr.rel (0) target = $region21
  $region20: #{_cnn_forward_impl.1} parent=0 // pred_region
    _
  $region21: #{_cnn_forward_impl.1} parent=0 // pred_fallthru
    _
  // Predicated region
  $region22: #{_cnn_forward_impl.1} parent=0 // pred_check
    _
  $region23: #{_cnn_forward_impl.1} parent=0 // pred_check_branch
    %22 = sbr.rel (0) target = $region25
  $region24: #{_cnn_forward_impl.1} parent=0 // pred_region
    _
  $region25: #{_cnn_forward_impl.1} parent=0 // pred_fallthru
    _
  %v24 = vld [vmem:[%s0] sm:$0xf]
  %v25 = vld [vmem:[%s0 + $0x4] sm:$0xf]
  %v26 = vld [vmem:[%s1] sm:$0xff]
  %v27 = vld [vmem:[%s1 + $0x8] sm:$0xff]
  %v28 = vld [vmem:[%s1 + $0x10] sm:$0xff]
  %v29 = vld [vmem:[%s1 + $0x18] sm:$0xff]
  %v30 = vld [vmem:[%s1 + $0x20] sm:$0xff]
  %v31 = vld [vmem:[%s1 + $0x28] sm:$0xff]
  %v32 = vld [vmem:[%s1 + $0x30] sm:$0xff]
  %v33 = vld [vmem:[%s1 + $0x38] sm:$0xff]
  %v34 = vld [vmem:[%s1 + $0x40] sm:$0xff]
  %v35 = vld [vmem:[%s1 + $0x48] sm:$0xff]
  %v36 = vld [vmem:[%s1 + $0x50] sm:$0xff]
  %v37 = vld [vmem:[%s1 + $0x58] sm:$0xff]
  %v38 = vld [vmem:[%s1 + $0x60] sm:$0xff]
  %v39 = vld [vmem:[%s1 + $0x68] sm:$0xff]
  %v40 = vld [vmem:[%s1 + $0x70] sm:$0xff]
  %v41 = vld [vmem:[%s1 + $0x78] sm:$0xff]
  %v44 = vunpack.c.l.b16 %v24
  %v45 = vunpack.c.l.b16 %v25
  %v46 = vpack.c.b16 %v45, %v44
  %v64 = vunpack.c.l.b16 %v26
  %v65 = vunpack.c.h.b16 %v26
  %v66 = vunpack.c.l.b16 %v27
  %v67 = vunpack.c.h.b16 %v27
  %v68 = vunpack.c.l.b16 %v28
  %v69 = vunpack.c.h.b16 %v28
  %v70 = vunpack.c.l.b16 %v29
  %v71 = vunpack.c.h.b16 %v29
  %v72 = vunpack.c.l.b16 %v30
  %v73 = vunpack.c.h.b16 %v30
  %v74 = vunpack.c.l.b16 %v31
  %v75 = vunpack.c.h.b16 %v31
  %v76 = vunpack.c.l.b16 %v32
  %v77 = vunpack.c.h.b16 %v32
  %v78 = vunpack.c.l.b16 %v33
  %v79 = vunpack.c.h.b16 %v33
  %v80 = vunpack.c.l.b16 %v34
  %v81 = vunpack.c.h.b16 %v34
  %v82 = vunpack.c.l.b16 %v35
  %v83 = vunpack.c.h.b16 %v35
  %v84 = vunpack.c.l.b16 %v36
  %v85 = vunpack.c.h.b16 %v36
  %v86 = vunpack.c.l.b16 %v37
  %v87 = vunpack.c.h.b16 %v37
  %v88 = vunpack.c.l.b16 %v38
  %v89 = vunpack.c.h.b16 %v38
  %v90 = vunpack.c.l.b16 %v39
  %v91 = vunpack.c.h.b16 %v39
  %v92 = vunpack.c.l.b16 %v40
  %v93 = vunpack.c.h.b16 %v40
  %v94 = vunpack.c.l.b16 %v41
  %v95 = vunpack.c.h.b16 %v41
  %v96 = vpack.c.b16 %v66, %v64
  %v97 = vpack.c.b16 %v67, %v65
  %v98 = vpack.c.b16 %v70, %v68
  %v99 = vpack.c.b16 %v71, %v69
  %v100 = vpack.c.b16 %v74, %v72
  %v101 = vpack.c.b16 %v75, %v73
  %v102 = vpack.c.b16 %v78, %v76
  %v103 = vpack.c.b16 %v79, %v77
  %v104 = vpack.c.b16 %v82, %v80
  %v105 = vpack.c.b16 %v83, %v81
  %v106 = vpack.c.b16 %v86, %v84
  %v107 = vpack.c.b16 %v87, %v85
  %v108 = vpack.c.b16 %v90, %v88
  %v109 = vpack.c.b16 %v91, %v89
  %v110 = vpack.c.b16 %v94, %v92
  %v111 = vpack.c.b16 %v95, %v93
  %128 = vmatprep.subr.bf16.mxu0 %v111
  %129 = vmatpush1.bf16.msra.mxu0 %v110
  %130 = vmatprep.subr.bf16.mxu0 %v109
  %131 = vmatpush1.bf16.msra.mxu0 %v108
  %132 = vmatprep.subr.bf16.mxu0 %v107
  %133 = vmatpush1.bf16.msra.mxu0 %v106
  %134 = vmatprep.subr.bf16.mxu0 %v105
  %135 = vmatpush1.bf16.msra.mxu0 %v104
  %136 = vmatprep.subr.bf16.mxu0 %v103
  %137 = vmatpush1.bf16.msra.mxu0 %v102
  %138 = vmatprep.subr.bf16.mxu0 %v101
  %139 = vmatpush1.bf16.msra.mxu0 %v100
  %140 = vmatprep.subr.bf16.mxu0 %v99
  %141 = vmatpush1.bf16.msra.mxu0 %v98
  %142 = vmatprep.subr.bf16.mxu0 %v97
  %143 = vmatpush1.bf16.msra.mxu0 %v96
  %144 = vmatprep.subr.bf16.mxu0 0
  %145 = vmatpush2.bf16.msra.mxu0 0
  %146 = vmatprep.subr.bf16.mxu0 0
  %147 = vmatpush2.bf16.msra.mxu0 0
  %148 = vmatprep.subr.bf16.mxu0 0
  %149 = vmatpush2.bf16.msra.mxu0 0
  %150 = vmatprep.subr.bf16.mxu0 0
  %151 = vmatpush2.bf16.msra.mxu0 0
  %152 = vmatprep.subr.bf16.mxu0 0
  %153 = vmatpush2.bf16.msra.mxu0 0
  %154 = vmatprep.subr.bf16.mxu0 0
  %155 = vmatpush2.bf16.msra.mxu0 0
  %156 = vmatprep.subr.bf16.mxu0 0
  %157 = vmatpush2.bf16.msra.mxu0 0
  %158 = vmatprep.subr.bf16.mxu0 0
  %159 = vmatpush2.bf16.msra.mxu0 0
  %160 = vmatprep.mubr.bf16.mxu0 0
  %161 = vmatmul.mubr.bf16.gmra.mxu0 %v46
  %v162 = vpop.f32.mrf.mxu0
  %v163 = vadd.f32 0.0, %v162
  %v164 = vpop.f32.mrf.mxu0
  %v165 = vadd.f32 0.0, %v164
  %v166 = vpop.f32.mrf.mxu0
  %v167 = vadd.f32 0.0, %v166
  %v168 = vpop.f32.mrf.mxu0
  %v169 = vadd.f32 0.0, %v168
  %170 = vdwg.mxu0
  %v171 = vmax.f32 %v163, 0.0
  %v172 = vmax.f32 %v165, 0.0
  %v173 = vmax.f32 %v167, 0.0
  %v174 = vmax.f32 %v169, 0.0
  %v175 = vpack.c.bf16 %v173, %v171
  %v176 = vpack.c.bf16 %v174, %v172
  %v177 = vld [vmem:[%s2] sm:$0xf]
  %v178 = vld [vmem:[%s2 + $0x4] sm:$0xf]
  %v179 = vld [vmem:[%s2 + $0x8] sm:$0xf]
  %v180 = vld [vmem:[%s2 + $0xc] sm:$0xf]
  %v181 = vld [vmem:[%s2 + $0x10] sm:$0xf]
  %v182 = vld [vmem:[%s2 + $0x14] sm:$0xf]
  %v183 = vld [vmem:[%s2 + $0x18] sm:$0xf]
  %v184 = vld [vmem:[%s2 + $0x1c] sm:$0xf]
  %v185 = vld [vmem:[%s2 + $0x20] sm:$0xf]
  %v186 = vld [vmem:[%s2 + $0x24] sm:$0xf]
  %v187 = vld [vmem:[%s2 + $0x28] sm:$0xf]
  %v188 = vld [vmem:[%s2 + $0x2c] sm:$0xf]
  %v189 = vld [vmem:[%s2 + $0x30] sm:$0xf]
  %v190 = vld [vmem:[%s2 + $0x34] sm:$0xf]
  %v191 = vld [vmem:[%s2 + $0x38] sm:$0xf]
  %v192 = vld [vmem:[%s2 + $0x3c] sm:$0xf]
  %v193 = vld [vmem:[%s2 + $0x40] sm:$0xf]
  %v194 = vld [vmem:[%s2 + $0x44] sm:$0xf]
  %v195 = vld [vmem:[%s2 + $0x48] sm:$0xf]
  %v196 = vld [vmem:[%s2 + $0x4c] sm:$0xf]
  %v197 = vld [vmem:[%s2 + $0x50] sm:$0xf]
  %v198 = vld [vmem:[%s2 + $0x54] sm:$0xf]
  %v199 = vld [vmem:[%s2 + $0x58] sm:$0xf]
  %v200 = vld [vmem:[%s2 + $0x5c] sm:$0xf]
  %v201 = vld [vmem:[%s2 + $0x60] sm:$0xf]
  %v202 = vld [vmem:[%s2 + $0x64] sm:$0xf]
  %v203 = vld [vmem:[%s2 + $0x68] sm:$0xf]
  %v204 = vld [vmem:[%s2 + $0x6c] sm:$0xf]
  %v205 = vld [vmem:[%s2 + $0x70] sm:$0xf]
  %v206 = vld [vmem:[%s2 + $0x74] sm:$0xf]
  %v207 = vld [vmem:[%s2 + $0x78] sm:$0xf]
  %v208 = vld [vmem:[%s2 + $0x7c] sm:$0xf]
  %v241 = vunpack.c.l.b16 %v177
  %v242 = vunpack.c.l.b16 %v178
  %v243 = vunpack.c.l.b16 %v179
  %v244 = vunpack.c.l.b16 %v180
  %v245 = vunpack.c.l.b16 %v181
  %v246 = vunpack.c.l.b16 %v182
  %v247 = vunpack.c.l.b16 %v183
  %v248 = vunpack.c.l.b16 %v184
  %v249 = vunpack.c.l.b16 %v185
  %v250 = vunpack.c.l.b16 %v186
  %v251 = vunpack.c.l.b16 %v187
  %v252 = vunpack.c.l.b16 %v188
  %v253 = vunpack.c.l.b16 %v189
  %v254 = vunpack.c.l.b16 %v190
  %v255 = vunpack.c.l.b16 %v191
  %v256 = vunpack.c.l.b16 %v192
  %v257 = vunpack.c.l.b16 %v193
  %v258 = vunpack.c.l.b16 %v194
  %v259 = vunpack.c.l.b16 %v195
  %v260 = vunpack.c.l.b16 %v196
  %v261 = vunpack.c.l.b16 %v197
  %v262 = vunpack.c.l.b16 %v198
  %v263 = vunpack.c.l.b16 %v199
  %v264 = vunpack.c.l.b16 %v200
  %v265 = vunpack.c.l.b16 %v201
  %v266 = vunpack.c.l.b16 %v202
  %v267 = vunpack.c.l.b16 %v203
  %v268 = vunpack.c.l.b16 %v204
  %v269 = vunpack.c.l.b16 %v205
  %v270 = vunpack.c.l.b16 %v206
  %v271 = vunpack.c.l.b16 %v207
  %v272 = vunpack.c.l.b16 %v208
  %v273 = vpack.c.b16 %v242, %v241
  %v274 = vpack.c.b16 %v244, %v243
  %v275 = vpack.c.b16 %v246, %v245
  %v276 = vpack.c.b16 %v248, %v247
  %v277 = vpack.c.b16 %v250, %v249
  %v278 = vpack.c.b16 %v252, %v251
  %v279 = vpack.c.b16 %v254, %v253
  %v280 = vpack.c.b16 %v256, %v255
  %v281 = vpack.c.b16 %v258, %v257
  %v282 = vpack.c.b16 %v260, %v259
  %v283 = vpack.c.b16 %v262, %v261
  %v284 = vpack.c.b16 %v264, %v263
  %v285 = vpack.c.b16 %v266, %v265
  %v286 = vpack.c.b16 %v268, %v267
  %v287 = vpack.c.b16 %v270, %v269
  %v288 = vpack.c.b16 %v272, %v271
  %305 = vmatprep.subr.bf16.mxu0 0
  %306 = vmatpush1.bf16.msra.mxu0 %v280
  %307 = vmatprep.subr.bf16.mxu0 0
  %308 = vmatpush1.bf16.msra.mxu0 %v279
  %309 = vmatprep.subr.bf16.mxu0 0
  %310 = vmatpush1.bf16.msra.mxu0 %v278
  %311 = vmatprep.subr.bf16.mxu0 0
  %312 = vmatpush1.bf16.msra.mxu0 %v277
  %313 = vmatprep.subr.bf16.mxu0 0
  %314 = vmatpush1.bf16.msra.mxu0 %v276
  %315 = vmatprep.subr.bf16.mxu0 0
  %316 = vmatpush1.bf16.msra.mxu0 %v275
  %317 = vmatprep.subr.bf16.mxu0 0
  %318 = vmatpush1.bf16.msra.mxu0 %v274
  %319 = vmatprep.subr.bf16.mxu0 0
  %320 = vmatpush1.bf16.msra.mxu0 %v273
  %321 = vmatprep.subr.bf16.mxu0 0
  %322 = vmatpush2.bf16.msra.mxu0 %v288
  %323 = vmatprep.subr.bf16.mxu0 0
  %324 = vmatpush2.bf16.msra.mxu0 %v287
  %325 = vmatprep.subr.bf16.mxu0 0
  %326 = vmatpush2.bf16.msra.mxu0 %v286
  %327 = vmatprep.subr.bf16.mxu0 0
  %328 = vmatpush2.bf16.msra.mxu0 %v285
  %329 = vmatprep.subr.bf16.mxu0 0
  %330 = vmatpush2.bf16.msra.mxu0 %v284
  %331 = vmatprep.subr.bf16.mxu0 0
  %332 = vmatpush2.bf16.msra.mxu0 %v283
  %333 = vmatprep.subr.bf16.mxu0 0
  %334 = vmatpush2.bf16.msra.mxu0 %v282
  %335 = vmatprep.subr.bf16.mxu0 0
  %336 = vmatpush2.bf16.msra.mxu0 %v281
  %337 = vmatprep.mubr.bf16.mxu0 %v176
  %338 = vmatmul.mubr.bf16.gmra.mxu0 %v175
  %v339 = vpop.f32.mrf.mxu0
  %v340 = vadd.f32 0.0, %v339
  %v341 = vpop.f32.mrf.mxu0
  %v342 = vpop.f32.mrf.mxu0
  %v343 = vadd.f32 0.0, %v342
  %v344 = vpop.f32.mrf.mxu0
  %345 = vdwg.mxu0
  %v346 = vmax.f32 %v340, 0.0
  %v347 = vmax.f32 %v343, 0.0
  %v348 = vpack.c.bf16 %v347, %v346
  %v349 = vld [vmem:[%s3] sm:$0xf]
  %v350 = vld [vmem:[%s3 + $0x4] sm:$0xf]
  %v351 = vld [vmem:[%s3 + $0x8] sm:$0xf]
  %v352 = vld [vmem:[%s3 + $0xc] sm:$0xf]
  %v353 = vld [vmem:[%s3 + $0x10] sm:$0xf]
  %v354 = vld [vmem:[%s3 + $0x14] sm:$0xf]
  %v355 = vld [vmem:[%s3 + $0x18] sm:$0xf]
  %v356 = vld [vmem:[%s3 + $0x1c] sm:$0xf]
  %v357 = vld [vmem:[%s3 + $0x20] sm:$0xf]
  %v358 = vld [vmem:[%s3 + $0x24] sm:$0xf]
  %v359 = vld [vmem:[%s3 + $0x28] sm:$0xf]
  %v360 = vld [vmem:[%s3 + $0x2c] sm:$0xf]
  %v361 = vld [vmem:[%s3 + $0x30] sm:$0xf]
  %v362 = vld [vmem:[%s3 + $0x34] sm:$0xf]
  %v363 = vld [vmem:[%s3 + $0x38] sm:$0xf]
  %v364 = vld [vmem:[%s3 + $0x3c] sm:$0xf]
  %v381 = vunpack.c.l.b16 %v349
  %v382 = vunpack.c.l.b16 %v350
  %v383 = vunpack.c.l.b16 %v351
  %v384 = vunpack.c.l.b16 %v352
  %v385 = vunpack.c.l.b16 %v353
  %v386 = vunpack.c.l.b16 %v354
  %v387 = vunpack.c.l.b16 %v355
  %v388 = vunpack.c.l.b16 %v356
  %v389 = vunpack.c.l.b16 %v357
  %v390 = vunpack.c.l.b16 %v358
  %v391 = vunpack.c.l.b16 %v359
  %v392 = vunpack.c.l.b16 %v360
  %v393 = vunpack.c.l.b16 %v361
  %v394 = vunpack.c.l.b16 %v362
  %v395 = vunpack.c.l.b16 %v363
  %v396 = vunpack.c.l.b16 %v364
  %v397 = vpack.c.b16 %v382, %v381
  %v398 = vpack.c.b16 %v384, %v383
  %v399 = vpack.c.b16 %v386, %v385
  %v400 = vpack.c.b16 %v388, %v387
  %v401 = vpack.c.b16 %v390, %v389
  %v402 = vpack.c.b16 %v392, %v391
  %v403 = vpack.c.b16 %v394, %v393
  %v404 = vpack.c.b16 %v396, %v395
  %413 = vmatprep.subr.bf16.mxu0 0
  %414 = vmatpush1.bf16.msra.mxu0 %v404
  %415 = vmatprep.subr.bf16.mxu0 0
  %416 = vmatpush1.bf16.msra.mxu0 %v403
  %417 = vmatprep.subr.bf16.mxu0 0
  %418 = vmatpush1.bf16.msra.mxu0 %v402
  %419 = vmatprep.subr.bf16.mxu0 0
  %420 = vmatpush1.bf16.msra.mxu0 %v401
  %421 = vmatprep.subr.bf16.mxu0 0
  %422 = vmatpush1.bf16.msra.mxu0 %v400
  %423 = vmatprep.subr.bf16.mxu0 0
  %424 = vmatpush1.bf16.msra.mxu0 %v399
  %425 = vmatprep.subr.bf16.mxu0 0
  %426 = vmatpush1.bf16.msra.mxu0 %v398
  %427 = vmatprep.subr.bf16.mxu0 0
  %428 = vmatpush1.bf16.msra.mxu0 %v397
  %429 = vmatprep.subr.bf16.mxu0 0
  %430 = vmatpush2.bf16.msra.mxu0 0
  %431 = vmatprep.subr.bf16.mxu0 0
  %432 = vmatpush2.bf16.msra.mxu0 0
  %433 = vmatprep.subr.bf16.mxu0 0
  %434 = vmatpush2.bf16.msra.mxu0 0
  %435 = vmatprep.subr.bf16.mxu0 0
  %436 = vmatpush2.bf16.msra.mxu0 0
  %437 = vmatprep.subr.bf16.mxu0 0
  %438 = vmatpush2.bf16.msra.mxu0 0
  %439 = vmatprep.subr.bf16.mxu0 0
  %440 = vmatpush2.bf16.msra.mxu0 0
  %441 = vmatprep.subr.bf16.mxu0 0
  %442 = vmatpush2.bf16.msra.mxu0 0
  %443 = vmatprep.subr.bf16.mxu0 0
  %444 = vmatpush2.bf16.msra.mxu0 0
  %445 = vmatprep.mubr.bf16.mxu0 0
  %446 = vmatmul.mubr.bf16.gmra.mxu0 %v348
  %v447 = vpop.f32.mrf.mxu0
  %v448 = vadd.f32 0.0, %v447
  %v449 = vpop.f32.mrf.mxu0
  %v450 = vpop.f32.mrf.mxu0
  %v451 = vadd.f32 0.0, %v450
  %v452 = vpop.f32.mrf.mxu0
  %453 = vdwg.mxu0
  %v454 = vmax.f32 %v448, 0.0
  %v455 = vmax.f32 %v451, 0.0
  %v456 = vpack.c.bf16 %v455, %v454
  %v457 = vld [vmem:[%s4] sm:$0xf]
  %v458 = vld [vmem:[%s4 + $0x4] sm:$0xf]
  %v459 = vld [vmem:[%s4 + $0x8] sm:$0xf]
  %v460 = vld [vmem:[%s4 + $0xc] sm:$0xf]
  %v461 = vld [vmem:[%s4 + $0x10] sm:$0xf]
  %v462 = vld [vmem:[%s4 + $0x14] sm:$0xf]
  %v463 = vld [vmem:[%s4 + $0x18] sm:$0xf]
  %v464 = vld [vmem:[%s4 + $0x1c] sm:$0xf]
  %v465 = vld [vmem:[%s4 + $0x20] sm:$0xf]
  %v466 = vld [vmem:[%s4 + $0x24] sm:$0xf]
  %v467 = vld [vmem:[%s4 + $0x28] sm:$0xf]
  %v468 = vld [vmem:[%s4 + $0x2c] sm:$0xf]
  %v469 = vld [vmem:[%s4 + $0x30] sm:$0xf]
  %v470 = vld [vmem:[%s4 + $0x34] sm:$0xf]
  %v471 = vld [vmem:[%s4 + $0x38] sm:$0xf]
  %v472 = vld [vmem:[%s4 + $0x3c] sm:$0xf]
  %v489 = vunpack.c.l.b16 %v457
  %v490 = vunpack.c.l.b16 %v458
  %v491 = vunpack.c.l.b16 %v459
  %v492 = vunpack.c.l.b16 %v460
  %v493 = vunpack.c.l.b16 %v461
  %v494 = vunpack.c.l.b16 %v462
  %v495 = vunpack.c.l.b16 %v463
  %v496 = vunpack.c.l.b16 %v464
  %v497 = vunpack.c.l.b16 %v465
  %v498 = vunpack.c.l.b16 %v466
  %v499 = vunpack.c.l.b16 %v467
  %v500 = vunpack.c.l.b16 %v468
  %v501 = vunpack.c.l.b16 %v469
  %v502 = vunpack.c.l.b16 %v470
  %v503 = vunpack.c.l.b16 %v471
  %v504 = vunpack.c.l.b16 %v472
  %v505 = vpack.c.b16 %v490, %v489
  %v506 = vpack.c.b16 %v492, %v491
  %v507 = vpack.c.b16 %v494, %v493
  %v508 = vpack.c.b16 %v496, %v495
  %v509 = vpack.c.b16 %v498, %v497
  %v510 = vpack.c.b16 %v500, %v499
  %v511 = vpack.c.b16 %v502, %v501
  %v512 = vpack.c.b16 %v504, %v503
  %521 = vmatprep.subr.bf16.mxu0 0
  %522 = vmatpush1.bf16.msra.mxu0 %v512
  %523 = vmatprep.subr.bf16.mxu0 0
  %524 = vmatpush1.bf16.msra.mxu0 %v511
  %525 = vmatprep.subr.bf16.mxu0 0
  %526 = vmatpush1.bf16.msra.mxu0 %v510
  %527 = vmatprep.subr.bf16.mxu0 0
  %528 = vmatpush1.bf16.msra.mxu0 %v509
  %529 = vmatprep.subr.bf16.mxu0 0
  %530 = vmatpush1.bf16.msra.mxu0 %v508
  %531 = vmatprep.subr.bf16.mxu0 0
  %532 = vmatpush1.bf16.msra.mxu0 %v507
  %533 = vmatprep.subr.bf16.mxu0 0
  %534 = vmatpush1.bf16.msra.mxu0 %v506
  %535 = vmatprep.subr.bf16.mxu0 0
  %536 = vmatpush1.bf16.msra.mxu0 %v505
  %537 = vmatprep.subr.bf16.mxu0 0
  %538 = vmatpush2.bf16.msra.mxu0 0
  %539 = vmatprep.subr.bf16.mxu0 0
  %540 = vmatpush2.bf16.msra.mxu0 0
  %541 = vmatprep.subr.bf16.mxu0 0
  %542 = vmatpush2.bf16.msra.mxu0 0
  %543 = vmatprep.subr.bf16.mxu0 0
  %544 = vmatpush2.bf16.msra.mxu0 0
  %545 = vmatprep.subr.bf16.mxu0 0
  %546 = vmatpush2.bf16.msra.mxu0 0
  %547 = vmatprep.subr.bf16.mxu0 0
  %548 = vmatpush2.bf16.msra.mxu0 0
  %549 = vmatprep.subr.bf16.mxu0 0
  %550 = vmatpush2.bf16.msra.mxu0 0
  %551 = vmatprep.subr.bf16.mxu0 0
  %552 = vmatpush2.bf16.msra.mxu0 0
  %553 = vmatprep.mubr.bf16.mxu0 0
  %554 = vmatmul.mubr.bf16.gmra.mxu0 %v456
  %v555 = vpop.f32.mrf.mxu0
  %v556 = vadd.f32 0.0, %v555
  %v557 = vpop.f32.mrf.mxu0
  %v558 = vpop.f32.mrf.mxu0
  %v559 = vadd.f32 0.0, %v558
  %v560 = vpop.f32.mrf.mxu0
  %561 = vdwg.mxu0
  %v562 = vmax.f32 %v556, 0.0
  %v563 = vmax.f32 %v559, 0.0
  %v564 = vpack.c.bf16 %v563, %v562
  %v565 = vld [vmem:[%s5] sm:$0xf]
  %v566 = vld [vmem:[%s5 + $0x4] sm:$0xf]
  %v567 = vld [vmem:[%s5 + $0x8] sm:$0xf]
  %v568 = vld [vmem:[%s5 + $0xc] sm:$0xf]
  %v569 = vld [vmem:[%s5 + $0x10] sm:$0xf]
  %v570 = vld [vmem:[%s5 + $0x14] sm:$0xf]
  %v571 = vld [vmem:[%s5 + $0x18] sm:$0xf]
  %v572 = vld [vmem:[%s5 + $0x1c] sm:$0xf]
  %v573 = vld [vmem:[%s5 + $0x20] sm:$0xf]
  %v574 = vld [vmem:[%s5 + $0x24] sm:$0xf]
  %v575 = vld [vmem:[%s5 + $0x28] sm:$0xf]
  %v576 = vld [vmem:[%s5 + $0x2c] sm:$0xf]
  %v577 = vld [vmem:[%s5 + $0x30] sm:$0xf]
  %v578 = vld [vmem:[%s5 + $0x34] sm:$0xf]
  %v579 = vld [vmem:[%s5 + $0x38] sm:$0xf]
  %v580 = vld [vmem:[%s5 + $0x3c] sm:$0xf]
  %v597 = vunpack.c.l.b16 %v565
  %v598 = vunpack.c.l.b16 %v566
  %v599 = vunpack.c.l.b16 %v567
  %v600 = vunpack.c.l.b16 %v568
  %v601 = vunpack.c.l.b16 %v569
  %v602 = vunpack.c.l.b16 %v570
  %v603 = vunpack.c.l.b16 %v571
  %v604 = vunpack.c.l.b16 %v572
  %v605 = vunpack.c.l.b16 %v573
  %v606 = vunpack.c.l.b16 %v574
  %v607 = vunpack.c.l.b16 %v575
  %v608 = vunpack.c.l.b16 %v576
  %v609 = vunpack.c.l.b16 %v577
  %v610 = vunpack.c.l.b16 %v578
  %v611 = vunpack.c.l.b16 %v579
  %v612 = vunpack.c.l.b16 %v580
  %v613 = vpack.c.b16 %v598, %v597
  %v614 = vpack.c.b16 %v600, %v599
  %v615 = vpack.c.b16 %v602, %v601
  %v616 = vpack.c.b16 %v604, %v603
  %v617 = vpack.c.b16 %v606, %v605
  %v618 = vpack.c.b16 %v608, %v607
  %v619 = vpack.c.b16 %v610, %v609
  %v620 = vpack.c.b16 %v612, %v611
  %629 = vmatprep.subr.bf16.mxu0 0
  %630 = vmatpush1.bf16.msra.mxu0 %v620
  %631 = vmatprep.subr.bf16.mxu0 0
  %632 = vmatpush1.bf16.msra.mxu0 %v619
  %633 = vmatprep.subr.bf16.mxu0 0
  %634 = vmatpush1.bf16.msra.mxu0 %v618
  %635 = vmatprep.subr.bf16.mxu0 0
  %636 = vmatpush1.bf16.msra.mxu0 %v617
  %637 = vmatprep.subr.bf16.mxu0 0
  %638 = vmatpush1.bf16.msra.mxu0 %v616
  %639 = vmatprep.subr.bf16.mxu0 0
  %640 = vmatpush1.bf16.msra.mxu0 %v615
  %641 = vmatprep.subr.bf16.mxu0 0
  %642 = vmatpush1.bf16.msra.mxu0 %v614
  %643 = vmatprep.subr.bf16.mxu0 0
  %644 = vmatpush1.bf16.msra.mxu0 %v613
  %645 = vmatprep.subr.bf16.mxu0 0
  %646 = vmatpush2.bf16.msra.mxu0 0
  %647 = vmatprep.subr.bf16.mxu0 0
  %648 = vmatpush2.bf16.msra.mxu0 0
  %649 = vmatprep.subr.bf16.mxu0 0
  %650 = vmatpush2.bf16.msra.mxu0 0
  %651 = vmatprep.subr.bf16.mxu0 0
  %652 = vmatpush2.bf16.msra.mxu0 0
  %653 = vmatprep.subr.bf16.mxu0 0
  %654 = vmatpush2.bf16.msra.mxu0 0
  %655 = vmatprep.subr.bf16.mxu0 0
  %656 = vmatpush2.bf16.msra.mxu0 0
  %657 = vmatprep.subr.bf16.mxu0 0
  %658 = vmatpush2.bf16.msra.mxu0 0
  %659 = vmatprep.subr.bf16.mxu0 0
  %660 = vmatpush2.bf16.msra.mxu0 0
  %661 = vmatprep.mubr.bf16.mxu0 0
  %662 = vmatmul.mubr.bf16.gmra.mxu0 %v564
  %v663 = vpop.f32.mrf.mxu0
  %v664 = vadd.f32 0.0, %v663
  %v665 = vpop.f32.mrf.mxu0
  %v666 = vpop.f32.mrf.mxu0
  %v667 = vadd.f32 0.0, %v666
  %v668 = vpop.f32.mrf.mxu0
  %669 = vdwg.mxu0
  %670 = vmax.xlane.f32.xlu0 %v664
  %v671 = vpop.xlane.xlu0 %670
  %672 = vmax.xlane.f32.xlu0 %v667
  %v673 = vpop.xlane.xlu0 %672
  %v674 = vsub.f32 %v664, %v671
  %v675 = vsub.f32 %v667, %v673
  %v676 = vmul.f32 %v674, 1.442695
  %v677 = vpow.pop %v676
  %v678 = vmul.f32 %v675, 1.442695
  %v679 = vpow.pop %v678
  %680 = vadd.xlane.f32.xlu0 %v677
  %v681 = vpop.xlane.xlu0 %680
  %682 = vadd.xlane.f32.xlu0 %v679
  %v683 = vpop.xlane.xlu0 %682
  %v684 = vrcp.pop %v681
  %v685 = vrcp.pop %v683
  %v686 = vmul.f32 %v677, %v684
  %v687 = vmul.f32 %v679, %v685
  %688 = vst [vmem:[%s6] sm:$0xff] %v686
  %689 = vst [vmem:[%s6 + $0x8] sm:$0xff] %v687
  // Predicated region
  $region26: #{_cnn_forward_impl.1} parent=0 // pred_check
    _
  $region27: #{_cnn_forward_impl.1} parent=0 // pred_check_branch
    %691 = sbr.rel (0) target = $region29
  $region28: #{_cnn_forward_impl.1} parent=0 // pred_region
    _
  $region29: #{_cnn_forward_impl.1} parent=0 // pred_fallthru
    _
  // Predicated region
  $region30: #{_cnn_forward_impl.1} parent=0 // pred_check
    _
  $region31: #{_cnn_forward_impl.1} parent=0 // pred_check_branch
    %693 = sbr.rel (0) target = $region33
  $region32: #{_cnn_forward_impl.1} parent=0 // pred_region
    _
  $region33: #{_cnn_forward_impl.1} parent=0 // pred_fallthru
    _

</llo_original>
